<compile_context>
chip_gen: v7x
topology: tpu7x:2x2x1
jax: 0.10.0
libtpu: 0.0.40
codegen_flags: <defaults>
</compile_context>

<pallas_src>
import functools

import jax
import jax.numpy as jnp
from jax.experimental import pallas as pl
from jax.experimental.pallas import tpu as pltpu


IN_FEATURES = 28 * 28            # 784
H1, H2, OUT = 100, 50, 10        # logical layer widths
H1_PAD, H2_PAD = 128, 128        # lane-padded hidden widths (full vregs)
OUT_PAD = 16                     # narrow lane pad for the output (10 -> 16)


def mlp_kernel(x_ref, w1_ref, b1_ref, w2_ref, b2_ref, w3_ref, b3_ref, o_ref):
    """Fused 3-layer MLP on one (TB, 784) f32 batch tile."""
    # Layer 1: (TB, 784) @ (784, 128) -> f32, +bias, ReLU
    h = jnp.dot(x_ref[...], w1_ref[...], preferred_element_type=jnp.float32)
    h = jnp.maximum(h + b1_ref[...], 0.0)

    # Layer 2: (TB, 128) @ (128, 128) -> f32, +bias, ReLU
    h = jnp.dot(h, w2_ref[...], preferred_element_type=jnp.float32)
    h = jnp.maximum(h + b2_ref[...], 0.0)

    # Layer 3: (TB, 128) @ (128, 16) -> f32, +bias (no activation)
    h = jnp.dot(h, w3_ref[...], preferred_element_type=jnp.float32)
    o_ref[...] = (h + b3_ref[...]).astype(o_ref.dtype)


def _pad_to(a, shape):
    return jnp.pad(a, [(0, t - s) for s, t in zip(a.shape, shape)])


@functools.partial(jax.jit, static_argnames=("block_rows",))
def my_neural_net_forward(x, params, *, block_rows=2048):
    """Forward pass of MyNeuralNet.

    x: any shape whose trailing dims flatten to 784 (e.g. (B, 1, 28, 28)).
    params: (w1, b1, w2, b2, w3, b3) with weights stored as (in, out).
    """
    assert block_rows % 8 == 0 and block_rows >= 8
    w1, b1, w2, b2, w3, b3 = params
    x2d = x.reshape(-1, IN_FEATURES)                      # x.view(-1, 784)
    B = x2d.shape[0]

    # --- lane-pad weights / biases (tiny, VMEM-resident); all stay f32 ---
    w1p = _pad_to(w1, (IN_FEATURES, H1_PAD)).astype(jnp.float32)
    w2p = _pad_to(w2, (H1_PAD, H2_PAD)).astype(jnp.float32)
    w3p = _pad_to(w3, (H2_PAD, OUT_PAD)).astype(jnp.float32)
    b1p = _pad_to(b1.reshape(1, -1), (1, H1_PAD)).astype(jnp.float32)
    b2p = _pad_to(b2.reshape(1, -1), (1, H2_PAD)).astype(jnp.float32)
    b3p = _pad_to(b3.reshape(1, -1), (1, OUT_PAD)).astype(jnp.float32)

    # --- batch tiling (no full-array pad; ragged last block is fine) ---
    Bp = max(B, 8)                         # only micro-batches (<8 rows) get padded
    if Bp != B:
        x2d = _pad_to(x2d, (Bp, IN_FEATURES))
    tb = min(block_rows, ((Bp + 7) // 8) * 8)
    # v7x megacore: prefer >= 2 grid steps when the batch is big enough.
    if Bp >= 16 and pl.cdiv(Bp, tb) < 2:
        tb = ((pl.cdiv(Bp, 2) + 7) // 8) * 8
    grid_b = pl.cdiv(Bp, tb)

    # --- VMEM budget for the chosen tile (covers v5e 16 MiB default scoped,
    #     capped below v7x's 64 MiB physical) ---
    weight_bytes = 4 * (IN_FEATURES * H1_PAD + H1_PAD * H2_PAD + H2_PAD * OUT_PAD
                        + H1_PAD + H2_PAD + OUT_PAD)
    vmem_bytes = (2 * tb * IN_FEATURES * 4      # double-buffered x tile
                  + 2 * tb * OUT_PAD * 4        # double-buffered out tile
                  + 2 * weight_bytes            # resident weights/biases
                  + (8 << 20))                  # intermediates / compiler scratch
    vmem_limit = int(min(vmem_bytes, 64 << 20))

    resident = lambda shape: pl.BlockSpec(shape, lambda i: (0, 0))

    out = pl.pallas_call(
        mlp_kernel,
        out_shape=jax.ShapeDtypeStruct((Bp, OUT_PAD), jnp.float32),
        grid=(grid_b,),
        in_specs=[
            pl.BlockSpec((tb, IN_FEATURES), lambda i: (i, 0)),       # x tile
            resident((IN_FEATURES, H1_PAD)), resident((1, H1_PAD)),  # w1, b1
            resident((H1_PAD, H2_PAD)),      resident((1, H2_PAD)),  # w2, b2
            resident((H2_PAD, OUT_PAD)),     resident((1, OUT_PAD)), # w3, b3
        ],
        out_specs=pl.BlockSpec((tb, OUT_PAD), lambda i: (i, 0)),
        compiler_params=pltpu.CompilerParams(
            dimension_semantics=("parallel",),
            vmem_limit_bytes=vmem_limit),
    )(x2d, w1p, b1p, w2p, b2p, w3p, b3p)

    # Drop padded rows / padded output lanes; mimic PyTorch .squeeze().
    return jnp.squeeze(out[:B, :OUT])


def init_params(key):
    """Deterministic init mimicking nn.Linear's U(-1/sqrt(fan_in), 1/sqrt(fan_in)).
    Weights are stored as (in_features, out_features)."""
    dims = [(IN_FEATURES, H1), (H1, H2), (H2, OUT)]
    params = []
    for i, (fan_in, fan_out) in enumerate(dims):
        kw, kb = jax.random.split(jax.random.fold_in(key, i))
        bound = 1.0 / jnp.sqrt(float(fan_in))
        w = jax.random.uniform(kw, (fan_in, fan_out), jnp.float32, -bound, bound)
        b = jax.random.uniform(kb, (1, fan_out), jnp.float32, -bound, bound)
        params += [w, b]
    return tuple(params)


if __name__ == "__main__":
    key = jax.random.PRNGKey(0)
    params = init_params(key)

    # Small example batch consistent with the module: (B, 1, 28, 28)
    x = jax.random.normal(jax.random.fold_in(key, 100), (2, 1, 28, 28), jnp.float32)

    out = my_neural_net_forward(x, params)
    out = jax.block_until_ready(out)

    # Plain-JAX f32 reference (same math as the PyTorch forward).
    w1, b1, w2, b2, w3, b3 = params
    xr = x.reshape(-1, IN_FEATURES)
    h = jnp.maximum(jnp.dot(xr, w1) + b1, 0.0)
    h = jnp.maximum(jnp.dot(h, w2) + b2, 0.0)
    ref = jnp.squeeze(jnp.dot(h, w3) + b3)

    assert out.shape == (2, 10), out.shape
    assert jnp.allclose(out, ref, atol=2e-2, rtol=2e-2), \
        float(jnp.max(jnp.abs(out - ref)))

    print("KERNEL_OK")
</pallas_src>

<mosaic_0001>
module attributes {stable_mosaic.version = 11 : i64} {
  func.func @mlp_kernel(%arg0: i32, %arg1: memref<8x784xf32, #tpu.memory_space<vmem>>, %arg2: memref<784x128xf32, #tpu.memory_space<vmem>>, %arg3: memref<1x128xf32, #tpu.memory_space<vmem>>, %arg4: memref<128x128xf32, #tpu.memory_space<vmem>>, %arg5: memref<1x128xf32, #tpu.memory_space<vmem>>, %arg6: memref<128x16xf32, #tpu.memory_space<vmem>>, %arg7: memref<1x16xf32, #tpu.memory_space<vmem>>, %arg8: memref<8x16xf32, #tpu.memory_space<vmem>>) attributes {dimension_semantics = [#tpu.dimension_semantics<parallel>], iteration_bounds = array<i64: 1>, scalar_prefetch = 0 : i64, scratch_operands = 0 : i64, tpu.core_type = #tpu.core_type<tc>, window_params = [{transform_indices = @transform_0, window_bounds = array<i64: 8, 784>}, {pipeline_mode = #tpu.pipeline_mode<synchronous>, transform_indices = @transform_1, window_bounds = array<i64: 784, 128>}, {pipeline_mode = #tpu.pipeline_mode<synchronous>, transform_indices = @transform_2, window_bounds = array<i64: 1, 128>}, {pipeline_mode = #tpu.pipeline_mode<synchronous>, transform_indices = @transform_3, window_bounds = array<i64: 128, 128>}, {pipeline_mode = #tpu.pipeline_mode<synchronous>, transform_indices = @transform_4, window_bounds = array<i64: 1, 128>}, {pipeline_mode = #tpu.pipeline_mode<synchronous>, transform_indices = @transform_5, window_bounds = array<i64: 128, 16>}, {pipeline_mode = #tpu.pipeline_mode<synchronous>, transform_indices = @transform_6, window_bounds = array<i64: 1, 16>}, {transform_indices = @transform_7, window_bounds = array<i64: 8, 16>}]} {
    %c0 = arith.constant 0 : index
    %c0_0 = arith.constant 0 : index
    %0 = vector.load %arg1[%c0, %c0_0] : memref<8x784xf32, #tpu.memory_space<vmem>>, vector<8x784xf32>
    %c0_1 = arith.constant 0 : index
    %c0_2 = arith.constant 0 : index
    %1 = vector.load %arg2[%c0_1, %c0_2] : memref<784x128xf32, #tpu.memory_space<vmem>>, vector<784x128xf32>
    %cst = arith.constant dense<0.000000e+00> : vector<8x128xf32>
    %2 = tpu.matmul %0, %1, %cst {dimension_numbers = #tpu.dot_dimension_numbers<[1], [0], [0], [1], [0, 0, 1, 1], [], []>} : vector<8x784xf32>, vector<784x128xf32>, vector<8x128xf32> -> vector<8x128xf32>
    %c0_3 = arith.constant 0 : index
    %c0_4 = arith.constant 0 : index
    %3 = vector.load %arg3[%c0_3, %c0_4] : memref<1x128xf32, #tpu.memory_space<vmem>>, vector<1x128xf32>
    %4 = vector.broadcast %3 : vector<1x128xf32> to vector<8x128xf32>
    %5 = arith.addf %2, %4 : vector<8x128xf32>
    %cst_5 = arith.constant 0.000000e+00 : f32
    %6 = vector.broadcast %cst_5 : f32 to vector<8x128xf32>
    %7 = arith.maximumf %5, %6 : vector<8x128xf32>
    %c0_6 = arith.constant 0 : index
    %c0_7 = arith.constant 0 : index
    %8 = vector.load %arg4[%c0_6, %c0_7] : memref<128x128xf32, #tpu.memory_space<vmem>>, vector<128x128xf32>
    %cst_8 = arith.constant dense<0.000000e+00> : vector<8x128xf32>
    %9 = tpu.matmul %7, %8, %cst_8 {dimension_numbers = #tpu.dot_dimension_numbers<[1], [0], [0], [1], [0, 0, 1, 1], [], []>} : vector<8x128xf32>, vector<128x128xf32>, vector<8x128xf32> -> vector<8x128xf32>
    %c0_9 = arith.constant 0 : index
    %c0_10 = arith.constant 0 : index
    %10 = vector.load %arg5[%c0_9, %c0_10] : memref<1x128xf32, #tpu.memory_space<vmem>>, vector<1x128xf32>
    %11 = vector.broadcast %10 : vector<1x128xf32> to vector<8x128xf32>
    %12 = arith.addf %9, %11 : vector<8x128xf32>
    %cst_11 = arith.constant 0.000000e+00 : f32
    %13 = vector.broadcast %cst_11 : f32 to vector<8x128xf32>
    %14 = arith.maximumf %12, %13 : vector<8x128xf32>
    %c0_12 = arith.constant 0 : index
    %c0_13 = arith.constant 0 : index
    %15 = vector.load %arg6[%c0_12, %c0_13] : memref<128x16xf32, #tpu.memory_space<vmem>>, vector<128x16xf32>
    %cst_14 = arith.constant dense<0.000000e+00> : vector<8x16xf32>
    %16 = tpu.matmul %14, %15, %cst_14 {dimension_numbers = #tpu.dot_dimension_numbers<[1], [0], [0], [1], [0, 0, 1, 1], [], []>} : vector<8x128xf32>, vector<128x16xf32>, vector<8x16xf32> -> vector<8x16xf32>
    %c0_15 = arith.constant 0 : index
    %c0_16 = arith.constant 0 : index
    %17 = vector.load %arg7[%c0_15, %c0_16] : memref<1x16xf32, #tpu.memory_space<vmem>>, vector<1x16xf32>
    %18 = vector.broadcast %17 : vector<1x16xf32> to vector<8x16xf32>
    %19 = arith.addf %16, %18 : vector<8x16xf32>
    %c0_17 = arith.constant 0 : index
    %c0_18 = arith.constant 0 : index
    %20 = vector.load %arg8[%c0_17, %c0_18] : memref<8x16xf32, #tpu.memory_space<vmem>>, vector<8x16xf32>
    tpu.vector_store %arg8[%c0_17, %c0_18], %19 {strides = array<i32>} : memref<8x16xf32, #tpu.memory_space<vmem>>, vector<8x16xf32>,
    return
  }
  func.func @transform_0(%arg0: i32) -> (i32, i32) {
    %c0_i32 = arith.constant 0 : i32
    %c0_i32_0 = arith.constant 0 : i32
    return %arg0, %c0_i32 : i32, i32
  }
  func.func @transform_1(%arg0: i32) -> (i32, i32) {
    %c0_i32 = arith.constant 0 : i32
    %c0_i32_0 = arith.constant 0 : i32
    %c0_i32_1 = arith.constant 0 : i32
    return %c0_i32, %c0_i32_0 : i32, i32
  }
  func.func @transform_2(%arg0: i32) -> (i32, i32) {
    %c0_i32 = arith.constant 0 : i32
    %c0_i32_0 = arith.constant 0 : i32
    %c0_i32_1 = arith.constant 0 : i32
    return %c0_i32, %c0_i32_0 : i32, i32
  }
  func.func @transform_3(%arg0: i32) -> (i32, i32) {
    %c0_i32 = arith.constant 0 : i32
    %c0_i32_0 = arith.constant 0 : i32
    %c0_i32_1 = arith.constant 0 : i32
    return %c0_i32, %c0_i32_0 : i32, i32
  }
  func.func @transform_4(%arg0: i32) -> (i32, i32) {
    %c0_i32 = arith.constant 0 : i32
    %c0_i32_0 = arith.constant 0 : i32
    %c0_i32_1 = arith.constant 0 : i32
    return %c0_i32, %c0_i32_0 : i32, i32
  }
  func.func @transform_5(%arg0: i32) -> (i32, i32) {
    %c0_i32 = arith.constant 0 : i32
    %c0_i32_0 = arith.constant 0 : i32
    %c0_i32_1 = arith.constant 0 : i32
    return %c0_i32, %c0_i32_0 : i32, i32
  }
  func.func @transform_6(%arg0: i32) -> (i32, i32) {
    %c0_i32 = arith.constant 0 : i32
    %c0_i32_0 = arith.constant 0 : i32
    %c0_i32_1 = arith.constant 0 : i32
    return %c0_i32, %c0_i32_0 : i32, i32
  }
  func.func @transform_7(%arg0: i32) -> (i32, i32) {
    %c0_i32 = arith.constant 0 : i32
    %c0_i32_0 = arith.constant 0 : i32
    return %arg0, %c0_i32 : i32, i32
  }
}

</mosaic_0001>

<llo_original>
// kernel: my_neural_net_forward.1
$region0: #{my_neural_net_forward.1}
  #allocation0 [shape = 'u32[]', space=smem, size = 0x4, offset = 0x4, fixed_abs, tag = 'smem constant byte address 0x4 - core index']
  #allocation1 [shape = 'u32[144,128]{1,0:T(1,128)}', space=vmem, size = 0x12000, scoped, tag = 'internal scratch']
  %s0 = inlined_call_operand.vmem [shape: f32[8,784], index: 0, kind: input, shape index: {}]
  %s1 = inlined_call_operand.vmem [shape: f32[784,128], index: 1, kind: input, shape index: {}]
  %s2 = inlined_call_operand.vmem [shape: f32[1,128], index: 2, kind: input, shape index: {}]
  %s3 = inlined_call_operand.vmem [shape: f32[128,128], index: 3, kind: input, shape index: {}]
  %s4 = inlined_call_operand.vmem [shape: f32[1,128], index: 4, kind: input, shape index: {}]
  %s5 = inlined_call_operand.vmem [shape: f32[128,16], index: 5, kind: input, shape index: {}]
  %s6 = inlined_call_operand.vmem [shape: f32[1,16], index: 6, kind: input, shape index: {}]
  %s7 = inlined_call_operand.vmem [shape: f32[8,16], index: 7, kind: output, shape index: {}]
  %s8 = sld [smem:[#allocation0]]
  $region38: #{my_neural_net_forward.1} parent=0
    _
  %s10 = ssub.s32 1, %s8
  %s11 = scalar_select 0, %s10, %s8
  // Predicated region
  $region2: #{my_neural_net_forward.1} parent=0 // pred_check
    _
  $region3: #{my_neural_net_forward.1} parent=0 // pred_check_branch
    %13 = sbr.rel (0) target = $region5
  $region4: #{my_neural_net_forward.1} parent=0 // pred_region
    _
  $region5: #{my_neural_net_forward.1} parent=0 // pred_fallthru
    _
  // Predicated region
  $region6: #{my_neural_net_forward.1} parent=0 // pred_check
    _
  $region7: #{my_neural_net_forward.1} parent=0 // pred_check_branch
    %15 = sbr.rel (0) target = $region9
  $region8: #{my_neural_net_forward.1} parent=0 // pred_region
    _
  $region9: #{my_neural_net_forward.1} parent=0 // pred_fallthru
    _
  // Predicated region
  $region10: #{my_neural_net_forward.1} parent=0 // pred_check
    _
  $region11: #{my_neural_net_forward.1} parent=0 // pred_check_branch
    %17 = sbr.rel (0) target = $region13
  $region12: #{my_neural_net_forward.1} parent=0 // pred_region
    _
  $region13: #{my_neural_net_forward.1} parent=0 // pred_fallthru
    _
  // Predicated region
  $region14: #{my_neural_net_forward.1} parent=0 // pred_check
    _
  $region15: #{my_neural_net_forward.1} parent=0 // pred_check_branch
    %19 = sbr.rel (0) target = $region17
  $region16: #{my_neural_net_forward.1} parent=0 // pred_region
    _
  $region17: #{my_neural_net_forward.1} parent=0 // pred_fallthru
    _
  // Predicated region
  $region18: #{my_neural_net_forward.1} parent=0 // pred_check
    _
  $region19: #{my_neural_net_forward.1} parent=0 // pred_check_branch
    %21 = sbr.rel (0) target = $region21
  $region20: #{my_neural_net_forward.1} parent=0 // pred_region
    _
  $region21: #{my_neural_net_forward.1} parent=0 // pred_fallthru
    _
  // Predicated region
  $region22: #{my_neural_net_forward.1} parent=0 // pred_check
    _
  $region23: #{my_neural_net_forward.1} parent=0 // pred_check_branch
    %23 = sbr.rel (0) target = $region25
  $region24: #{my_neural_net_forward.1} parent=0 // pred_region
    _
  $region25: #{my_neural_net_forward.1} parent=0 // pred_fallthru
    _
  // Predicated region
  $region26: #{my_neural_net_forward.1} parent=0 // pred_check
    _
  $region27: #{my_neural_net_forward.1} parent=0 // pred_check_branch
    %25 = sbr.rel (0) target = $region29
  $region28: #{my_neural_net_forward.1} parent=0 // pred_region
    _
  $region29: #{my_neural_net_forward.1} parent=0 // pred_fallthru
    _
  %v26 = vld [vmem:[%s0] sm:$0xff]
  %v27 = vld [vmem:[%s0 + $0x8] sm:$0xff]
  %v28 = vld [vmem:[%s0 + $0x10] sm:$0xff]
  %v29 = vld [vmem:[%s0 + $0x18] sm:$0xff]
  %v30 = vld [vmem:[%s0 + $0x20] sm:$0xff]
  %v31 = vld [vmem:[%s0 + $0x28] sm:$0xff]
  %v32 = vld [vmem:[%s0 + $0x30] sm:$0xff]
  %v33 = vld [vmem:[%s1] sm:$0xff]
  %v34 = vld [vmem:[%s1 + $0x8] sm:$0xff]
  %v35 = vld [vmem:[%s1 + $0x10] sm:$0xff]
  %v36 = vld [vmem:[%s1 + $0x18] sm:$0xff]
  %v37 = vld [vmem:[%s1 + $0x20] sm:$0xff]
  %v38 = vld [vmem:[%s1 + $0x28] sm:$0xff]
  %v39 = vld [vmem:[%s1 + $0x30] sm:$0xff]
  %v40 = vld [vmem:[%s1 + $0x38] sm:$0xff]
  %v41 = vld [vmem:[%s1 + $0x40] sm:$0xff]
  %v42 = vld [vmem:[%s1 + $0x48] sm:$0xff]
  %v43 = vld [vmem:[%s1 + $0x50] sm:$0xff]
  %v44 = vld [vmem:[%s1 + $0x58] sm:$0xff]
  %v45 = vld [vmem:[%s1 + $0x60] sm:$0xff]
  %v46 = vld [vmem:[%s1 + $0x68] sm:$0xff]
  %v47 = vld [vmem:[%s1 + $0x70] sm:$0xff]
  %v48 = vld [vmem:[%s1 + $0x78] sm:$0xff]
  %v49 = vld [vmem:[%s1 + $0x80] sm:$0xff]
  %v50 = vld [vmem:[%s1 + $0x88] sm:$0xff]
  %v51 = vld [vmem:[%s1 + $0x90] sm:$0xff]
  %v52 = vld [vmem:[%s1 + $0x98] sm:$0xff]
  %v53 = vld [vmem:[%s1 + $0xa0] sm:$0xff]
  %v54 = vld [vmem:[%s1 + $0xa8] sm:$0xff]
  %v55 = vld [vmem:[%s1 + $0xb0] sm:$0xff]
  %v56 = vld [vmem:[%s1 + $0xb8] sm:$0xff]
  %v57 = vld [vmem:[%s1 + $0xc0] sm:$0xff]
  %v58 = vld [vmem:[%s1 + $0xc8] sm:$0xff]
  %v59 = vld [vmem:[%s1 + $0xd0] sm:$0xff]
  %v60 = vld [vmem:[%s1 + $0xd8] sm:$0xff]
  %v61 = vld [vmem:[%s1 + $0xe0] sm:$0xff]
  %v62 = vld [vmem:[%s1 + $0xe8] sm:$0xff]
  %v63 = vld [vmem:[%s1 + $0xf0] sm:$0xff]
  %v64 = vld [vmem:[%s1 + $0xf8] sm:$0xff]
  %v65 = vld [vmem:[%s1 + $0x100] sm:$0xff]
  %v66 = vld [vmem:[%s1 + $0x108] sm:$0xff]
  %v67 = vld [vmem:[%s1 + $0x110] sm:$0xff]
  %v68 = vld [vmem:[%s1 + $0x118] sm:$0xff]
  %v69 = vld [vmem:[%s1 + $0x120] sm:$0xff]
  %v70 = vld [vmem:[%s1 + $0x128] sm:$0xff]
  %v71 = vld [vmem:[%s1 + $0x130] sm:$0xff]
  %v72 = vld [vmem:[%s1 + $0x138] sm:$0xff]
  %v73 = vld [vmem:[%s1 + $0x140] sm:$0xff]
  %v74 = vld [vmem:[%s1 + $0x148] sm:$0xff]
  %v75 = vld [vmem:[%s1 + $0x150] sm:$0xff]
  %v76 = vld [vmem:[%s1 + $0x158] sm:$0xff]
  %v77 = vld [vmem:[%s1 + $0x160] sm:$0xff]
  %v78 = vld [vmem:[%s1 + $0x168] sm:$0xff]
  %v79 = vld [vmem:[%s1 + $0x170] sm:$0xff]
  %v80 = vld [vmem:[%s1 + $0x178] sm:$0xff]
  %v81 = vld [vmem:[%s1 + $0x180] sm:$0xff]
  %v82 = vld [vmem:[%s1 + $0x188] sm:$0xff]
  %v83 = vld [vmem:[%s1 + $0x190] sm:$0xff]
  %v84 = vld [vmem:[%s1 + $0x198] sm:$0xff]
  %v85 = vld [vmem:[%s1 + $0x1a0] sm:$0xff]
  %v86 = vld [vmem:[%s1 + $0x1a8] sm:$0xff]
  %v87 = vld [vmem:[%s1 + $0x1b0] sm:$0xff]
  %v88 = vld [vmem:[%s1 + $0x1b8] sm:$0xff]
  %v89 = vld [vmem:[%s1 + $0x1c0] sm:$0xff]
  %v90 = vld [vmem:[%s1 + $0x1c8] sm:$0xff]
  %v91 = vld [vmem:[%s1 + $0x1d0] sm:$0xff]
  %v92 = vld [vmem:[%s1 + $0x1d8] sm:$0xff]
  %v93 = vld [vmem:[%s1 + $0x1e0] sm:$0xff]
  %v94 = vld [vmem:[%s1 + $0x1e8] sm:$0xff]
  %v95 = vld [vmem:[%s1 + $0x1f0] sm:$0xff]
  %v96 = vld [vmem:[%s1 + $0x1f8] sm:$0xff]
  %v97 = vld [vmem:[%s1 + $0x200] sm:$0xff]
  %v98 = vld [vmem:[%s1 + $0x208] sm:$0xff]
  %v99 = vld [vmem:[%s1 + $0x210] sm:$0xff]
  %v100 = vld [vmem:[%s1 + $0x218] sm:$0xff]
  %v101 = vld [vmem:[%s1 + $0x220] sm:$0xff]
  %v102 = vld [vmem:[%s1 + $0x228] sm:$0xff]
  %v103 = vld [vmem:[%s1 + $0x230] sm:$0xff]
  %v104 = vld [vmem:[%s1 + $0x238] sm:$0xff]
  %v105 = vld [vmem:[%s1 + $0x240] sm:$0xff]
  %v106 = vld [vmem:[%s1 + $0x248] sm:$0xff]
  %v107 = vld [vmem:[%s1 + $0x250] sm:$0xff]
  %v108 = vld [vmem:[%s1 + $0x258] sm:$0xff]
  %v109 = vld [vmem:[%s1 + $0x260] sm:$0xff]
  %v110 = vld [vmem:[%s1 + $0x268] sm:$0xff]
  %v111 = vld [vmem:[%s1 + $0x270] sm:$0xff]
  %v112 = vld [vmem:[%s1 + $0x278] sm:$0xff]
  %v113 = vld [vmem:[%s1 + $0x280] sm:$0xff]
  %v114 = vld [vmem:[%s1 + $0x288] sm:$0xff]
  %v115 = vld [vmem:[%s1 + $0x290] sm:$0xff]
  %v116 = vld [vmem:[%s1 + $0x298] sm:$0xff]
  %v117 = vld [vmem:[%s1 + $0x2a0] sm:$0xff]
  %v118 = vld [vmem:[%s1 + $0x2a8] sm:$0xff]
  %v119 = vld [vmem:[%s1 + $0x2b0] sm:$0xff]
  %v120 = vld [vmem:[%s1 + $0x2b8] sm:$0xff]
  %v121 = vld [vmem:[%s1 + $0x2c0] sm:$0xff]
  %v122 = vld [vmem:[%s1 + $0x2c8] sm:$0xff]
  %v123 = vld [vmem:[%s1 + $0x2d0] sm:$0xff]
  %v124 = vld [vmem:[%s1 + $0x2d8] sm:$0xff]
  %v125 = vld [vmem:[%s1 + $0x2e0] sm:$0xff]
  %v126 = vld [vmem:[%s1 + $0x2e8] sm:$0xff]
  %v127 = vld [vmem:[%s1 + $0x2f0] sm:$0xff]
  %v128 = vld [vmem:[%s1 + $0x2f8] sm:$0xff]
  %v129 = vld [vmem:[%s1 + $0x300] sm:$0xff]
  %v130 = vld [vmem:[%s1 + $0x308] sm:$0xff]
  %v131 = vld [vmem:[%s2] sm:$0x1]
  %v133 = vlaneseq
  %v134 = vshrl.u32 %v133, 7
  %v135 = vsub.s32 0, %v134
  %v136 = vrot.slane %v131, %v135
  %vm138 = vcmask 130048
  %v140 = vsel %vm138, %v32, 0
  %142 = vmatprep.subr.mxu0 0.0
  %143 = vmatpush1.msra.mxu0 %v33
  %144 = vmatprep.subr.mxu0 0.0
  %145 = vmatpush1.msra.mxu0 %v34
  %146 = vmatprep.subr.mxu0 0.0
  %147 = vmatpush1.msra.mxu0 %v35
  %148 = vmatprep.subr.mxu0 0.0
  %149 = vmatpush1.msra.mxu0 %v36
  %150 = vmatprep.subr.mxu0 0.0
  %151 = vmatpush1.msra.mxu0 %v37
  %152 = vmatprep.subr.mxu0 0.0
  %153 = vmatpush1.msra.mxu0 %v38
  %154 = vmatprep.subr.mxu0 0.0
  %155 = vmatpush1.msra.mxu0 %v39
  %156 = vmatprep.subr.mxu0 0.0
  %157 = vmatpush1.msra.mxu0 %v40
  %158 = vmatprep.subr.mxu0 0.0
  %159 = vmatpush1.msra.mxu0 %v41
  %160 = vmatprep.subr.mxu0 0.0
  %161 = vmatpush1.msra.mxu0 %v42
  %162 = vmatprep.subr.mxu0 0.0
  %163 = vmatpush1.msra.mxu0 %v43
  %164 = vmatprep.subr.mxu0 0.0
  %165 = vmatpush1.msra.mxu0 %v44
  %166 = vmatprep.subr.mxu0 0.0
  %167 = vmatpush1.msra.mxu0 %v45
  %168 = vmatprep.subr.mxu0 0.0
  %169 = vmatpush1.msra.mxu0 %v46
  %170 = vmatprep.subr.mxu0 0.0
  %171 = vmatpush1.msra.mxu0 %v47
  %172 = vmatprep.subr.mxu0 0.0
  %173 = vmatpush1.msra.mxu0 %v48
  %174 = vmatprep.subr.mxu0 0.0
  %175 = vmatpush1.msra.mxu0 %v49
  %176 = vmatprep.subr.mxu0 0.0
  %177 = vmatpush1.msra.mxu0 %v50
  %178 = vmatprep.subr.mxu0 0.0
  %179 = vmatpush1.msra.mxu0 %v51
  %180 = vmatprep.subr.mxu0 0.0
  %181 = vmatpush1.msra.mxu0 %v52
  %182 = vmatprep.subr.mxu0 0.0
  %183 = vmatpush1.msra.mxu0 %v53
  %184 = vmatprep.subr.mxu0 0.0
  %185 = vmatpush1.msra.mxu0 %v54
  %186 = vmatprep.subr.mxu0 0.0
  %187 = vmatpush1.msra.mxu0 %v55
  %188 = vmatprep.subr.mxu0 0.0
  %189 = vmatpush1.msra.mxu0 %v56
  %190 = vmatprep.subr.mxu0 0.0
  %191 = vmatpush1.msra.mxu0 %v57
  %192 = vmatprep.subr.mxu0 0.0
  %193 = vmatpush1.msra.mxu0 %v58
  %194 = vmatprep.subr.mxu0 0.0
  %195 = vmatpush1.msra.mxu0 %v59
  %196 = vmatprep.subr.mxu0 0.0
  %197 = vmatpush1.msra.mxu0 %v60
  %198 = vmatprep.subr.mxu0 0.0
  %199 = vmatpush1.msra.mxu0 %v61
  %200 = vmatprep.subr.mxu0 0.0
  %201 = vmatpush1.msra.mxu0 %v62
  %202 = vmatprep.subr.mxu0 0.0
  %203 = vmatpush1.msra.mxu0 %v63
  %204 = vmatprep.subr.mxu0 0.0
  %205 = vmatpush1.msra.mxu0 %v64
  %206 = vmatprep.mubr.f32.mxu0 %v27
  %207 = vmatmul.mubr.f32.gmra.mrb[0].mxu0 %v26
  %v208 = vpop.f32.mrb[0].mxu0
  %v209 = vadd.f32 %v136, %v208
  %v210 = vpop.f32.mrb[0].mxu0
  %211 = vdwg.mxu0
  %212 = vmatprep.subr.mxu0 0.0
  %213 = vmatpush1.msra.mxu0 %v65
  %214 = vmatprep.subr.mxu0 0.0
  %215 = vmatpush1.msra.mxu0 %v66
  %216 = vmatprep.subr.mxu0 0.0
  %217 = vmatpush1.msra.mxu0 %v67
  %218 = vmatprep.subr.mxu0 0.0
  %219 = vmatpush1.msra.mxu0 %v68
  %220 = vmatprep.subr.mxu0 0.0
  %221 = vmatpush1.msra.mxu0 %v69
  %222 = vmatprep.subr.mxu0 0.0
  %223 = vmatpush1.msra.mxu0 %v70
  %224 = vmatprep.subr.mxu0 0.0
  %225 = vmatpush1.msra.mxu0 %v71
  %226 = vmatprep.subr.mxu0 0.0
  %227 = vmatpush1.msra.mxu0 %v72
  %228 = vmatprep.subr.mxu0 0.0
  %229 = vmatpush1.msra.mxu0 %v73
  %230 = vmatprep.subr.mxu0 0.0
  %231 = vmatpush1.msra.mxu0 %v74
  %232 = vmatprep.subr.mxu0 0.0
  %233 = vmatpush1.msra.mxu0 %v75
  %234 = vmatprep.subr.mxu0 0.0
  %235 = vmatpush1.msra.mxu0 %v76
  %236 = vmatprep.subr.mxu0 0.0
  %237 = vmatpush1.msra.mxu0 %v77
  %238 = vmatprep.subr.mxu0 0.0
  %239 = vmatpush1.msra.mxu0 %v78
  %240 = vmatprep.subr.mxu0 0.0
  %241 = vmatpush1.msra.mxu0 %v79
  %242 = vmatprep.subr.mxu0 0.0
  %243 = vmatpush1.msra.mxu0 %v80
  %244 = vmatprep.subr.mxu0 0.0
  %245 = vmatpush1.msra.mxu0 %v81
  %246 = vmatprep.subr.mxu0 0.0
  %247 = vmatpush1.msra.mxu0 %v82
  %248 = vmatprep.subr.mxu0 0.0
  %249 = vmatpush1.msra.mxu0 %v83
  %250 = vmatprep.subr.mxu0 0.0
  %251 = vmatpush1.msra.mxu0 %v84
  %252 = vmatprep.subr.mxu0 0.0
  %253 = vmatpush1.msra.mxu0 %v85
  %254 = vmatprep.subr.mxu0 0.0
  %255 = vmatpush1.msra.mxu0 %v86
  %256 = vmatprep.subr.mxu0 0.0
  %257 = vmatpush1.msra.mxu0 %v87
  %258 = vmatprep.subr.mxu0 0.0
  %259 = vmatpush1.msra.mxu0 %v88
  %260 = vmatprep.subr.mxu0 0.0
  %261 = vmatpush1.msra.mxu0 %v89
  %262 = vmatprep.subr.mxu0 0.0
  %263 = vmatpush1.msra.mxu0 %v90
  %264 = vmatprep.subr.mxu0 0.0
  %265 = vmatpush1.msra.mxu0 %v91
  %266 = vmatprep.subr.mxu0 0.0
  %267 = vmatpush1.msra.mxu0 %v92
  %268 = vmatprep.subr.mxu0 0.0
  %269 = vmatpush1.msra.mxu0 %v93
  %270 = vmatprep.subr.mxu0 0.0
  %271 = vmatpush1.msra.mxu0 %v94
  %272 = vmatprep.subr.mxu0 0.0
  %273 = vmatpush1.msra.mxu0 %v95
  %274 = vmatprep.subr.mxu0 0.0
  %275 = vmatpush1.msra.mxu0 %v96
  %276 = vmatprep.mubr.f32.mxu0 %v29
  %277 = vmatmul.mubr.f32.gmra.mrb[0].mxu0 %v28
  %v278 = vpop.f32.mrb[0].mxu0
  %v279 = vadd.f32 %v209, %v278
  %v280 = vpop.f32.mrb[0].mxu0
  %281 = vdwg.mxu0
  %282 = vmatprep.subr.mxu0 0.0
  %283 = vmatpush1.msra.mxu0 %v97
  %284 = vmatprep.subr.mxu0 0.0
  %285 = vmatpush1.msra.mxu0 %v98
  %286 = vmatprep.subr.mxu0 0.0
  %287 = vmatpush1.msra.mxu0 %v99
  %288 = vmatprep.subr.mxu0 0.0
  %289 = vmatpush1.msra.mxu0 %v100
  %290 = vmatprep.subr.mxu0 0.0
  %291 = vmatpush1.msra.mxu0 %v101
  %292 = vmatprep.subr.mxu0 0.0
  %293 = vmatpush1.msra.mxu0 %v102
  %294 = vmatprep.subr.mxu0 0.0
  %295 = vmatpush1.msra.mxu0 %v103
  %296 = vmatprep.subr.mxu0 0.0
  %297 = vmatpush1.msra.mxu0 %v104
  %298 = vmatprep.subr.mxu0 0.0
  %299 = vmatpush1.msra.mxu0 %v105
  %300 = vmatprep.subr.mxu0 0.0
  %301 = vmatpush1.msra.mxu0 %v106
  %302 = vmatprep.subr.mxu0 0.0
  %303 = vmatpush1.msra.mxu0 %v107
  %304 = vmatprep.subr.mxu0 0.0
  %305 = vmatpush1.msra.mxu0 %v108
  %306 = vmatprep.subr.mxu0 0.0
  %307 = vmatpush1.msra.mxu0 %v109
  %308 = vmatprep.subr.mxu0 0.0
  %309 = vmatpush1.msra.mxu0 %v110
  %310 = vmatprep.subr.mxu0 0.0
  %311 = vmatpush1.msra.mxu0 %v111
  %312 = vmatprep.subr.mxu0 0.0
  %313 = vmatpush1.msra.mxu0 %v112
  %314 = vmatprep.subr.mxu0 0.0
  %315 = vmatpush1.msra.mxu0 %v113
  %316 = vmatprep.subr.mxu0 0.0
  %317 = vmatpush1.msra.mxu0 %v114
  %318 = vmatprep.subr.mxu0 0.0
  %319 = vmatpush1.msra.mxu0 %v115
  %320 = vmatprep.subr.mxu0 0.0
  %321 = vmatpush1.msra.mxu0 %v116
  %322 = vmatprep.subr.mxu0 0.0
  %323 = vmatpush1.msra.mxu0 %v117
  %324 = vmatprep.subr.mxu0 0.0
  %325 = vmatpush1.msra.mxu0 %v118
  %326 = vmatprep.subr.mxu0 0.0
  %327 = vmatpush1.msra.mxu0 %v119
  %328 = vmatprep.subr.mxu0 0.0
  %329 = vmatpush1.msra.mxu0 %v120
  %330 = vmatprep.subr.mxu0 0.0
  %331 = vmatpush1.msra.mxu0 %v121
  %332 = vmatprep.subr.mxu0 0.0
  %333 = vmatpush1.msra.mxu0 %v122
  %334 = vmatprep.subr.mxu0 0.0
  %335 = vmatpush1.msra.mxu0 %v123
  %336 = vmatprep.subr.mxu0 0.0
  %337 = vmatpush1.msra.mxu0 %v124
  %338 = vmatprep.subr.mxu0 0.0
  %339 = vmatpush1.msra.mxu0 %v125
  %340 = vmatprep.subr.mxu0 0.0
  %341 = vmatpush1.msra.mxu0 %v126
  %342 = vmatprep.subr.mxu0 0.0
  %343 = vmatpush1.msra.mxu0 %v127
  %344 = vmatprep.subr.mxu0 0.0
  %345 = vmatpush1.msra.mxu0 %v128
  %346 = vmatprep.mubr.f32.mxu0 %v31
  %347 = vmatmul.mubr.f32.gmra.mrb[0].mxu0 %v30
  %v348 = vpop.f32.mrb[0].mxu0
  %v349 = vadd.f32 %v279, %v348
  %v350 = vpop.f32.mrb[0].mxu0
  %351 = vdwg.mxu0
  %352 = vmatprep.subr.mxu0 0.0
  %353 = vmatpush1.msra.mxu0 %v129
  %354 = vmatprep.subr.mxu0 0.0
  %355 = vmatpush1.msra.mxu0 %v130
  %356 = vmatprep.subr.mxu0 0.0
  %357 = vmatpush1.msra.mxu0 0.0
  %358 = vmatprep.subr.mxu0 0.0
  %359 = vmatpush1.msra.mxu0 0.0
  %360 = vmatprep.subr.mxu0 0.0
  %361 = vmatpush1.msra.mxu0 0.0
  %362 = vmatprep.subr.mxu0 0.0
  %363 = vmatpush1.msra.mxu0 0.0
  %364 = vmatprep.subr.mxu0 0.0
  %365 = vmatpush1.msra.mxu0 0.0
  %366 = vmatprep.subr.mxu0 0.0
  %367 = vmatpush1.msra.mxu0 0.0
  %368 = vmatprep.subr.mxu0 0.0
  %369 = vmatpush1.msra.mxu0 0.0
  %370 = vmatprep.subr.mxu0 0.0
  %371 = vmatpush1.msra.mxu0 0.0
  %372 = vmatprep.subr.mxu0 0.0
  %373 = vmatpush1.msra.mxu0 0.0
  %374 = vmatprep.subr.mxu0 0.0
  %375 = vmatpush1.msra.mxu0 0.0
  %376 = vmatprep.subr.mxu0 0.0
  %377 = vmatpush1.msra.mxu0 0.0
  %378 = vmatprep.subr.mxu0 0.0
  %379 = vmatpush1.msra.mxu0 0.0
  %380 = vmatprep.subr.mxu0 0.0
  %381 = vmatpush1.msra.mxu0 0.0
  %382 = vmatprep.subr.mxu0 0.0
  %383 = vmatpush1.msra.mxu0 0.0
  %384 = vmatprep.subr.mxu0 0.0
  %385 = vmatpush1.msra.mxu0 0.0
  %386 = vmatprep.subr.mxu0 0.0
  %387 = vmatpush1.msra.mxu0 0.0
  %388 = vmatprep.subr.mxu0 0.0
  %389 = vmatpush1.msra.mxu0 0.0
  %390 = vmatprep.subr.mxu0 0.0
  %391 = vmatpush1.msra.mxu0 0.0
  %392 = vmatprep.subr.mxu0 0.0
  %393 = vmatpush1.msra.mxu0 0.0
  %394 = vmatprep.subr.mxu0 0.0
  %395 = vmatpush1.msra.mxu0 0.0
  %396 = vmatprep.subr.mxu0 0.0
  %397 = vmatpush1.msra.mxu0 0.0
  %398 = vmatprep.subr.mxu0 0.0
  %399 = vmatpush1.msra.mxu0 0.0
  %400 = vmatprep.subr.mxu0 0.0
  %401 = vmatpush1.msra.mxu0 0.0
  %402 = vmatprep.subr.mxu0 0.0
  %403 = vmatpush1.msra.mxu0 0.0
  %404 = vmatprep.subr.mxu0 0.0
  %405 = vmatpush1.msra.mxu0 0.0
  %406 = vmatprep.subr.mxu0 0.0
  %407 = vmatpush1.msra.mxu0 0.0
  %408 = vmatprep.subr.mxu0 0.0
  %409 = vmatpush1.msra.mxu0 0.0
  %410 = vmatprep.subr.mxu0 0.0
  %411 = vmatpush1.msra.mxu0 0.0
  %412 = vmatprep.subr.mxu0 0.0
  %413 = vmatpush1.msra.mxu0 0.0
  %414 = vmatprep.subr.mxu0 0.0
  %415 = vmatpush1.msra.mxu0 0.0
  %416 = vmatprep.mubr.f32.mxu0 0.0
  %417 = vmatmul.mubr.f32.gmra.mrb[0].mxu0 %v140
  %v418 = vpop.f32.mrb[0].mxu0
  %v419 = vadd.f32 %v349, %v418
  %v420 = vpop.f32.mrb[0].mxu0
  %421 = vdwg.mxu0
  %v422 = vmax.f32 %v419, 0.0
  %v423 = vld [vmem:[%s3] sm:$0xff]
  %v424 = vld [vmem:[%s3 + $0x8] sm:$0xff]
  %v425 = vld [vmem:[%s3 + $0x10] sm:$0xff]
  %v426 = vld [vmem:[%s3 + $0x18] sm:$0xff]
  %v427 = vld [vmem:[%s3 + $0x20] sm:$0xff]
  %v428 = vld [vmem:[%s3 + $0x28] sm:$0xff]
  %v429 = vld [vmem:[%s3 + $0x30] sm:$0xff]
  %v430 = vld [vmem:[%s3 + $0x38] sm:$0xff]
  %v431 = vld [vmem:[%s3 + $0x40] sm:$0xff]
  %v432 = vld [vmem:[%s3 + $0x48] sm:$0xff]
  %v433 = vld [vmem:[%s3 + $0x50] sm:$0xff]
  %v434 = vld [vmem:[%s3 + $0x58] sm:$0xff]
  %v435 = vld [vmem:[%s3 + $0x60] sm:$0xff]
  %v436 = vld [vmem:[%s3 + $0x68] sm:$0xff]
  %v437 = vld [vmem:[%s3 + $0x70] sm:$0xff]
  %v438 = vld [vmem:[%s3 + $0x78] sm:$0xff]
  %v439 = vld [vmem:[%s4] sm:$0x1]
  %v441 = vlaneseq
  %v442 = vshrl.u32 %v441, 7
  %v443 = vsub.s32 0, %v442
  %v444 = vrot.slane %v439, %v443
  %446 = vmatprep.subr.mxu0 0.0
  %447 = vmatpush1.msra.mxu0 %v423
  %448 = vmatprep.subr.mxu0 0.0
  %449 = vmatpush1.msra.mxu0 %v424
  %450 = vmatprep.subr.mxu0 0.0
  %451 = vmatpush1.msra.mxu0 %v425
  %452 = vmatprep.subr.mxu0 0.0
  %453 = vmatpush1.msra.mxu0 %v426
  %454 = vmatprep.subr.mxu0 0.0
  %455 = vmatpush1.msra.mxu0 %v427
  %456 = vmatprep.subr.mxu0 0.0
  %457 = vmatpush1.msra.mxu0 %v428
  %458 = vmatprep.subr.mxu0 0.0
  %459 = vmatpush1.msra.mxu0 %v429
  %460 = vmatprep.subr.mxu0 0.0
  %461 = vmatpush1.msra.mxu0 %v430
  %462 = vmatprep.subr.mxu0 0.0
  %463 = vmatpush1.msra.mxu0 %v431
  %464 = vmatprep.subr.mxu0 0.0
  %465 = vmatpush1.msra.mxu0 %v432
  %466 = vmatprep.subr.mxu0 0.0
  %467 = vmatpush1.msra.mxu0 %v433
  %468 = vmatprep.subr.mxu0 0.0
  %469 = vmatpush1.msra.mxu0 %v434
  %470 = vmatprep.subr.mxu0 0.0
  %471 = vmatpush1.msra.mxu0 %v435
  %472 = vmatprep.subr.mxu0 0.0
  %473 = vmatpush1.msra.mxu0 %v436
  %474 = vmatprep.subr.mxu0 0.0
  %475 = vmatpush1.msra.mxu0 %v437
  %476 = vmatprep.subr.mxu0 0.0
  %477 = vmatpush1.msra.mxu0 %v438
  %478 = vmatprep.subr.mxu0 0.0
  %479 = vmatpush1.msra.mxu0 0.0
  %480 = vmatprep.subr.mxu0 0.0
  %481 = vmatpush1.msra.mxu0 0.0
  %482 = vmatprep.subr.mxu0 0.0
  %483 = vmatpush1.msra.mxu0 0.0
  %484 = vmatprep.subr.mxu0 0.0
  %485 = vmatpush1.msra.mxu0 0.0
  %486 = vmatprep.subr.mxu0 0.0
  %487 = vmatpush1.msra.mxu0 0.0
  %488 = vmatprep.subr.mxu0 0.0
  %489 = vmatpush1.msra.mxu0 0.0
  %490 = vmatprep.subr.mxu0 0.0
  %491 = vmatpush1.msra.mxu0 0.0
  %492 = vmatprep.subr.mxu0 0.0
  %493 = vmatpush1.msra.mxu0 0.0
  %494 = vmatprep.subr.mxu0 0.0
  %495 = vmatpush1.msra.mxu0 0.0
  %496 = vmatprep.subr.mxu0 0.0
  %497 = vmatpush1.msra.mxu0 0.0
  %498 = vmatprep.subr.mxu0 0.0
  %499 = vmatpush1.msra.mxu0 0.0
  %500 = vmatprep.subr.mxu0 0.0
  %501 = vmatpush1.msra.mxu0 0.0
  %502 = vmatprep.subr.mxu0 0.0
  %503 = vmatpush1.msra.mxu0 0.0
  %504 = vmatprep.subr.mxu0 0.0
  %505 = vmatpush1.msra.mxu0 0.0
  %506 = vmatprep.subr.mxu0 0.0
  %507 = vmatpush1.msra.mxu0 0.0
  %508 = vmatprep.subr.mxu0 0.0
  %509 = vmatpush1.msra.mxu0 0.0
  %510 = vmatprep.mubr.f32.mxu0 0.0
  %511 = vmatmul.mubr.f32.gmra.mrb[0].mxu0 %v422
  %v512 = vpop.f32.mrb[0].mxu0
  %v513 = vadd.f32 %v444, %v512
  %v514 = vpop.f32.mrb[0].mxu0
  %515 = vdwg.mxu0
  %v516 = vmax.f32 %v513, 0.0
  %v517 = vld [vmem:[%s5] sm:$0xff]
  %v518 = vld [vmem:[%s5 + $0x8] sm:$0xff]
  %v519 = vld [vmem:[%s5 + $0x10] sm:$0xff]
  %v520 = vld [vmem:[%s5 + $0x18] sm:$0xff]
  %v521 = vld [vmem:[%s5 + $0x20] sm:$0xff]
  %v522 = vld [vmem:[%s5 + $0x28] sm:$0xff]
  %v523 = vld [vmem:[%s5 + $0x30] sm:$0xff]
  %v524 = vld [vmem:[%s5 + $0x38] sm:$0xff]
  %v525 = vld [vmem:[%s5 + $0x40] sm:$0xff]
  %v526 = vld [vmem:[%s5 + $0x48] sm:$0xff]
  %v527 = vld [vmem:[%s5 + $0x50] sm:$0xff]
  %v528 = vld [vmem:[%s5 + $0x58] sm:$0xff]
  %v529 = vld [vmem:[%s5 + $0x60] sm:$0xff]
  %v530 = vld [vmem:[%s5 + $0x68] sm:$0xff]
  %v531 = vld [vmem:[%s5 + $0x70] sm:$0xff]
  %v532 = vld [vmem:[%s5 + $0x78] sm:$0xff]
  %v533 = vld [vmem:[%s6] sm:$0x1]
  %v535 = vlaneseq
  %v536 = vshrl.u32 %v535, 7
  %v537 = vsub.s32 0, %v536
  %v538 = vrot.slane %v533, %v537
  %540 = vmatprep.subr.mxu0 0.0
  %541 = vmatpush1.msra.mxu0 %v517
  %542 = vmatprep.subr.mxu0 0.0
  %543 = vmatpush1.msra.mxu0 %v518
  %544 = vmatprep.subr.mxu0 0.0
  %545 = vmatpush1.msra.mxu0 %v519
  %546 = vmatprep.subr.mxu0 0.0
  %547 = vmatpush1.msra.mxu0 %v520
  %548 = vmatprep.subr.mxu0 0.0
  %549 = vmatpush1.msra.mxu0 %v521
  %550 = vmatprep.subr.mxu0 0.0
  %551 = vmatpush1.msra.mxu0 %v522
  %552 = vmatprep.subr.mxu0 0.0
  %553 = vmatpush1.msra.mxu0 %v523
  %554 = vmatprep.subr.mxu0 0.0
  %555 = vmatpush1.msra.mxu0 %v524
  %556 = vmatprep.subr.mxu0 0.0
  %557 = vmatpush1.msra.mxu0 %v525
  %558 = vmatprep.subr.mxu0 0.0
  %559 = vmatpush1.msra.mxu0 %v526
  %560 = vmatprep.subr.mxu0 0.0
  %561 = vmatpush1.msra.mxu0 %v527
  %562 = vmatprep.subr.mxu0 0.0
  %563 = vmatpush1.msra.mxu0 %v528
  %564 = vmatprep.subr.mxu0 0.0
  %565 = vmatpush1.msra.mxu0 %v529
  %566 = vmatprep.subr.mxu0 0.0
  %567 = vmatpush1.msra.mxu0 %v530
  %568 = vmatprep.subr.mxu0 0.0
  %569 = vmatpush1.msra.mxu0 %v531
  %570 = vmatprep.subr.mxu0 0.0
  %571 = vmatpush1.msra.mxu0 %v532
  %572 = vmatprep.subr.mxu0 0.0
  %573 = vmatpush1.msra.mxu0 0.0
  %574 = vmatprep.subr.mxu0 0.0
  %575 = vmatpush1.msra.mxu0 0.0
  %576 = vmatprep.subr.mxu0 0.0
  %577 = vmatpush1.msra.mxu0 0.0
  %578 = vmatprep.subr.mxu0 0.0
  %579 = vmatpush1.msra.mxu0 0.0
  %580 = vmatprep.subr.mxu0 0.0
  %581 = vmatpush1.msra.mxu0 0.0
  %582 = vmatprep.subr.mxu0 0.0
  %583 = vmatpush1.msra.mxu0 0.0
  %584 = vmatprep.subr.mxu0 0.0
  %585 = vmatpush1.msra.mxu0 0.0
  %586 = vmatprep.subr.mxu0 0.0
  %587 = vmatpush1.msra.mxu0 0.0
  %588 = vmatprep.subr.mxu0 0.0
  %589 = vmatpush1.msra.mxu0 0.0
  %590 = vmatprep.subr.mxu0 0.0
  %591 = vmatpush1.msra.mxu0 0.0
  %592 = vmatprep.subr.mxu0 0.0
  %593 = vmatpush1.msra.mxu0 0.0
  %594 = vmatprep.subr.mxu0 0.0
  %595 = vmatpush1.msra.mxu0 0.0
  %596 = vmatprep.subr.mxu0 0.0
  %597 = vmatpush1.msra.mxu0 0.0
  %598 = vmatprep.subr.mxu0 0.0
  %599 = vmatpush1.msra.mxu0 0.0
  %600 = vmatprep.subr.mxu0 0.0
  %601 = vmatpush1.msra.mxu0 0.0
  %602 = vmatprep.subr.mxu0 0.0
  %603 = vmatpush1.msra.mxu0 0.0
  %604 = vmatprep.mubr.f32.mxu0 0.0
  %605 = vmatmul.mubr.f32.gmra.mrb[0].mxu0 %v516
  %v606 = vpop.f32.mrb[0].mxu0
  %v607 = vadd.f32 %v538, %v606
  %v608 = vpop.f32.mrb[0].mxu0
  %609 = vdwg.mxu0
  %610 = vst.msk [vmem:[%s7] sm:$0xff] %vm138, %v607
  // Predicated region
  $region30: #{my_neural_net_forward.1} parent=0 // pred_check
    _
  $region31: #{my_neural_net_forward.1} parent=0 // pred_check_branch
    %612 = sbr.rel (0) target = $region33
  $region32: #{my_neural_net_forward.1} parent=0 // pred_region
    _
  $region33: #{my_neural_net_forward.1} parent=0 // pred_fallthru
    _
  // Predicated region
  $region34: #{my_neural_net_forward.1} parent=0 // pred_check
    _
  $region35: #{my_neural_net_forward.1} parent=0 // pred_check_branch
    %614 = sbr.rel (0) target = $region37
  $region36: #{my_neural_net_forward.1} parent=0 // pred_region
    _
  $region37: #{my_neural_net_forward.1} parent=0 // pred_fallthru
    _

</llo_original>
